<compile_context>
chip_gen: v6e
topology: v6e:2x2x1
jax: 0.10.0
libtpu: 0.0.40
codegen_flags: <defaults>
</compile_context>

<pallas_src>
import jax
import jax.numpy as jnp
from jax import lax
from jax.experimental import pallas as pl
from jax.experimental.pallas import tpu as pltpu


def _linear_nobias_kernel(x_ref, w_ref, o_ref):
    # x_ref: (Bp, Kp)  w_ref: (Np, Kp)  o_ref: (Bp, Np)
    # Contract on K for both operands (W stays in PyTorch [out, in] layout);
    # the MXU handles the transposed operand for free.
    o_ref[...] = lax.dot_general(
        x_ref[...],
        w_ref[...],
        dimension_numbers=(((1,), (1,)), ((), ())),
        preferred_element_type=jnp.float32,
    ).astype(o_ref.dtype)


def _round_up(v, m):
    return ((v + m - 1) // m) * m


def lstm_encoder_forward(x, fc_weight):
    """Pallas implementation of LSTM_Encoder.forward.

    x:         [batch, in_features]        float32
    fc_weight: [out_features, in_features] float32 (PyTorch nn.Linear layout)
    returns:   [batch, out_features]       float32
    """
    B, K = x.shape
    N, K2 = fc_weight.shape
    assert K == K2, "in_features mismatch"

    # Pad to lane-dense (last dim multiple of 128) and sublane-aligned
    # (second-to-last multiple of 8) shapes. Zero padding on K contributes
    # nothing to the contraction; padded N/B rows are sliced off afterwards.
    Bp = _round_up(B, 8)
    Kp = _round_up(K, 128)
    Np = _round_up(N, 128)

    if (Bp, Kp) != (B, K):
        x_p = jnp.zeros((Bp, Kp), x.dtype).at[:B, :K].set(x)
    else:
        x_p = x
    if (Np, Kp) != (N, K):
        w_p = jnp.zeros((Np, Kp), fc_weight.dtype).at[:N, :K].set(fc_weight)
    else:
        w_p = fc_weight

    # Single trip, whole (tiny) operands resident in VMEM: no grid, no
    # pipelining machinery, no scalar prefetch.
    out_p = pl.pallas_call(
        _linear_nobias_kernel,
        out_shape=jax.ShapeDtypeStruct((Bp, Np), jnp.float32),
        in_specs=[
            pl.BlockSpec(memory_space=pltpu.MemorySpace.VMEM),
            pl.BlockSpec(memory_space=pltpu.MemorySpace.VMEM),
        ],
        out_specs=pl.BlockSpec(memory_space=pltpu.MemorySpace.VMEM),
    )(x_p, w_p)

    return out_p[:B, :N]


if __name__ == "__main__":
    # Small shapes consistent with the module:
    #   in_features=16, out_features=32, batch=8
    # (n_states / n_hidden / n_actions only parameterize the unused LSTM cells.)
    in_features = 16
    out_features = 32
    batch = 8

    key = jax.random.PRNGKey(0)
    k_w, k_x = jax.random.split(key)

    # Deterministic init matching `self.fc.weight.data.normal_(0, 0.1)`.
    fc_weight = 0.1 * jax.random.normal(
        k_w, (out_features, in_features), dtype=jnp.float32
    )
    x = jax.random.normal(k_x, (batch, in_features), dtype=jnp.float32)

    # jit the whole wrapper so pad / pallas_call / slice compile as one program
    # (amortizes launch overhead of the padding glue around the kernel).
    fwd = jax.jit(lstm_encoder_forward)

    out = fwd(x, fc_weight)
    out = jax.block_until_ready(out)

    # Sanity check against plain-JAX reference of x @ W.T
    ref = x @ fc_weight.T
    assert out.shape == (batch, out_features)
    assert jnp.allclose(out, ref, atol=1e-5, rtol=1e-5)

    # TODO(synk): lstm_cell_left / lstm_cell_right are declared in __init__ but
    # never used in forward(), so they are intentionally not implemented.
    print("KERNEL_OK")
</pallas_src>

<mosaic_0001>
module attributes {stable_mosaic.version = 11 : i64} {
  func.func @_linear_nobias_kernel(%arg0: memref<8x128xf32, #tpu.memory_space<vmem>>, %arg1: memref<128x128xf32, #tpu.memory_space<vmem>>, %arg2: memref<8x128xf32, #tpu.memory_space<vmem>>) attributes {dimension_semantics = [], scalar_prefetch = 0 : i64, scratch_operands = 0 : i64, tpu.core_type = #tpu.core_type<tc>} {
    %c0 = arith.constant 0 : index
    %c0_0 = arith.constant 0 : index
    %0 = vector.load %arg0[%c0, %c0_0] : memref<8x128xf32, #tpu.memory_space<vmem>>, vector<8x128xf32>
    %c0_1 = arith.constant 0 : index
    %c0_2 = arith.constant 0 : index
    %1 = vector.load %arg1[%c0_1, %c0_2] : memref<128x128xf32, #tpu.memory_space<vmem>>, vector<128x128xf32>
    %cst = arith.constant dense<0.000000e+00> : vector<8x128xf32>
    %2 = tpu.matmul %0, %1, %cst {dimension_numbers = #tpu.dot_dimension_numbers<[1], [1], [0], [0], [0, 0, 1, 0], [], []>} : vector<8x128xf32>, vector<128x128xf32>, vector<8x128xf32> -> vector<8x128xf32>
    %c0_3 = arith.constant 0 : index
    %c0_4 = arith.constant 0 : index
    %3 = vector.load %arg2[%c0_3, %c0_4] : memref<8x128xf32, #tpu.memory_space<vmem>>, vector<8x128xf32>
    tpu.vector_store %arg2[%c0_3, %c0_4], %2 {strides = array<i32>} : memref<8x128xf32, #tpu.memory_space<vmem>>, vector<8x128xf32>,
    return
  }
}

</mosaic_0001>

<llo_original>
// kernel: lstm_encoder_forward.1
$region0: #{lstm_encoder_forward.1}
  #allocation0 [shape = 'u32[]', space=smem, size = 0x4, offset = 0x4, fixed_abs, tag = 'smem constant byte address 0x4 - core index']
  #allocation1 [shape = 'u32[144,128]{1,0:T(1,128)}', space=vmem, size = 0x12000, scoped, tag = 'internal scratch']
  %s0 = inlined_call_operand.vmem [shape: f32[8,128], index: 0, kind: input, shape index: {}]
  %s1 = inlined_call_operand.vmem [shape: f32[128,128], index: 1, kind: input, shape index: {}]
  %s2 = inlined_call_operand.hbm [shape: f32[8,128], index: 2, kind: output, shape index: {}]
  %s3 = sld [smem:[#allocation0]]
  $region18: #{lstm_encoder_forward.1} parent=0
    _
  %s5 = ssub.s32 1, %s3
  %s6 = scalar_select 0, %s5, %s3
  $region1: #{lstm_encoder_forward.1} parent=0
    #allocation2 [shape = 'u8[4096]{0}', space=vmem, size = 0x1000, scoped, tag = 'output window, operand 0, single buffered']
    #allocation3 [shape = 's32[1]{0}', space=sflag, size = 0x4, scoped, tag = 'scoped memory for lstm_encoder_forward.1']
    %7 = vsyncpa [#allocation3], 0
    // Predicated region
    $region2: #{lstm_encoder_forward.1} parent=1 // pred_check
      _
    $region3: #{lstm_encoder_forward.1} parent=1 // pred_check_branch
      %9 = sbr.rel (0) target = $region5
    $region4: #{lstm_encoder_forward.1} parent=1 // pred_region
      _
    $region5: #{lstm_encoder_forward.1} parent=1 // pred_fallthru
      _
    // Predicated region
    $region6: #{lstm_encoder_forward.1} parent=1 // pred_check
      _
    $region7: #{lstm_encoder_forward.1} parent=1 // pred_check_branch
      %11 = sbr.rel (0) target = $region9
    $region8: #{lstm_encoder_forward.1} parent=1 // pred_region
      _
    $region9: #{lstm_encoder_forward.1} parent=1 // pred_fallthru
      _
    %v12 = vld [vmem:[%s0] sm:$0xff]
    %v13 = vld [vmem:[%s1] sm:$0xff]
    %v14 = vld [vmem:[%s1 + $0x8] sm:$0xff]
    %v15 = vld [vmem:[%s1 + $0x10] sm:$0xff]
    %v16 = vld [vmem:[%s1 + $0x18] sm:$0xff]
    %v17 = vld [vmem:[%s1 + $0x20] sm:$0xff]
    %v18 = vld [vmem:[%s1 + $0x28] sm:$0xff]
    %v19 = vld [vmem:[%s1 + $0x30] sm:$0xff]
    %v20 = vld [vmem:[%s1 + $0x38] sm:$0xff]
    %v21 = vld [vmem:[%s1 + $0x40] sm:$0xff]
    %v22 = vld [vmem:[%s1 + $0x48] sm:$0xff]
    %v23 = vld [vmem:[%s1 + $0x50] sm:$0xff]
    %v24 = vld [vmem:[%s1 + $0x58] sm:$0xff]
    %v25 = vld [vmem:[%s1 + $0x60] sm:$0xff]
    %v26 = vld [vmem:[%s1 + $0x68] sm:$0xff]
    %v27 = vld [vmem:[%s1 + $0x70] sm:$0xff]
    %v28 = vld [vmem:[%s1 + $0x78] sm:$0xff]
    %29 = vmatprep.subr.mxu0 0.0
    %30 = vmatpush1.xpose.msra.mxu0 %v28
    %31 = vmatprep.subr.mxu0 0.0
    %32 = vmatpush1.xpose.msra.mxu0 %v27
    %33 = vmatprep.subr.mxu0 0.0
    %34 = vmatpush1.xpose.msra.mxu0 %v26
    %35 = vmatprep.subr.mxu0 0.0
    %36 = vmatpush1.xpose.msra.mxu0 %v25
    %37 = vmatprep.subr.mxu0 0.0
    %38 = vmatpush1.xpose.msra.mxu0 %v24
    %39 = vmatprep.subr.mxu0 0.0
    %40 = vmatpush1.xpose.msra.mxu0 %v23
    %41 = vmatprep.subr.mxu0 0.0
    %42 = vmatpush1.xpose.msra.mxu0 %v22
    %43 = vmatprep.subr.mxu0 0.0
    %44 = vmatpush1.xpose.msra.mxu0 %v21
    %45 = vmatprep.subr.mxu0 0.0
    %46 = vmatpush1.xpose.msra.mxu0 %v20
    %47 = vmatprep.subr.mxu0 0.0
    %48 = vmatpush1.xpose.msra.mxu0 %v19
    %49 = vmatprep.subr.mxu0 0.0
    %50 = vmatpush1.xpose.msra.mxu0 %v18
    %51 = vmatprep.subr.mxu0 0.0
    %52 = vmatpush1.xpose.msra.mxu0 %v17
    %53 = vmatprep.subr.mxu0 0.0
    %54 = vmatpush1.xpose.msra.mxu0 %v16
    %55 = vmatprep.subr.mxu0 0.0
    %56 = vmatpush1.xpose.msra.mxu0 %v15
    %57 = vmatprep.subr.mxu0 0.0
    %58 = vmatpush1.xpose.msra.mxu0 %v14
    %59 = vmatprep.subr.mxu0 0.0
    %60 = vmatpush1.xpose.msra.mxu0 %v13
    %61 = vmatprep.subr.mxu0 0.0
    %62 = vmatpush2.xpose.msra.mxu0 0.0
    %63 = vmatprep.subr.mxu0 0.0
    %64 = vmatpush2.xpose.msra.mxu0 0.0
    %65 = vmatprep.subr.mxu0 0.0
    %66 = vmatpush2.xpose.msra.mxu0 0.0
    %67 = vmatprep.subr.mxu0 0.0
    %68 = vmatpush2.xpose.msra.mxu0 0.0
    %69 = vmatprep.subr.mxu0 0.0
    %70 = vmatpush2.xpose.msra.mxu0 0.0
    %71 = vmatprep.subr.mxu0 0.0
    %72 = vmatpush2.xpose.msra.mxu0 0.0
    %73 = vmatprep.subr.mxu0 0.0
    %74 = vmatpush2.xpose.msra.mxu0 0.0
    %75 = vmatprep.subr.mxu0 0.0
    %76 = vmatpush2.xpose.msra.mxu0 0.0
    %77 = vmatprep.subr.mxu0 0.0
    %78 = vmatpush2.xpose.msra.mxu0 0.0
    %79 = vmatprep.subr.mxu0 0.0
    %80 = vmatpush2.xpose.msra.mxu0 0.0
    %81 = vmatprep.subr.mxu0 0.0
    %82 = vmatpush2.xpose.msra.mxu0 0.0
    %83 = vmatprep.subr.mxu0 0.0
    %84 = vmatpush2.xpose.msra.mxu0 0.0
    %85 = vmatprep.subr.mxu0 0.0
    %86 = vmatpush2.xpose.msra.mxu0 0.0
    %87 = vmatprep.subr.mxu0 0.0
    %88 = vmatpush2.xpose.msra.mxu0 0.0
    %89 = vmatprep.subr.mxu0 0.0
    %90 = vmatpush2.xpose.msra.mxu0 0.0
    %91 = vmatprep.subr.mxu0 0.0
    %92 = vmatpush2.xpose.msra.mxu0 0.0
    %93 = vmatprep.mubr.f32.mxu0 0.0
    %94 = vmatmul.mubr.f32.gmra.mxu0 %v12
    %v95 = vpop.f32.mrf.mxu0
    %v96 = vadd.f32 0.0, %v95
    %v97 = vpop.f32.mrf.mxu0
    %98 = vdwg.mxu0
    %99 = vst [vmem:[#allocation2] sm:$0xff] %v96
    // Predicated region
    $region10: #{lstm_encoder_forward.1} parent=1 // pred_check
      _
    $region11: #{lstm_encoder_forward.1} parent=1 // pred_check_branch
      %101 = sbr.rel (0) target = $region13
    $region12: #{lstm_encoder_forward.1} parent=1 // pred_region
      %s103 = ssub.s32 128, 128
      %104 = vsyncadd [#allocation3], %s103
      %s106 = sshll.u32 [#allocation2], 4
      %s107 = int_to_ptr.vmem [resolvable:$true] %s106
      %109 = dma.vmem_to_hbm [thread:$0]  %s107, 128, %s2, [#allocation3]
    $region13: #{lstm_encoder_forward.1} parent=1 // pred_fallthru
      _
    // Predicated region
    $region14: #{lstm_encoder_forward.1} parent=1 // pred_check
      _
    $region15: #{lstm_encoder_forward.1} parent=1 // pred_check_branch
      %111 = sbr.rel (0) target = $region17
    $region16: #{lstm_encoder_forward.1} parent=1 // pred_region
      %112 = dma.done [#allocation3], 128
    $region17: #{lstm_encoder_forward.1} parent=1 // pred_fallthru
      _
    %113 = vsyncpa [#allocation3], 1

</llo_original>
